<compile_context>
chip_gen: v7x
topology: tpu7x:2x2x1
jax: 0.10.0
libtpu: 0.0.40
codegen_flags: <defaults>
</compile_context>

<pallas_src>
import functools
import math

import numpy as np
import jax
import jax.numpy as jnp
from jax.experimental import pallas as pl
from jax.experimental.pallas import tpu as pltpu

# Module hyper-parameters (spatial_strip_att(dim, kernel=5, group=2, H=True))
DIM = 4
K = 5
GROUP = 2
PAD = K // 2


def _strip_att_kernel(x_ref, wT_ref, o_ref, *, width):
    # x_ref:  (nb, CP, H*W)  folded input block (CP = pair * C, lane-dense last dim)
    # wT_ref: (CP, K*CP)     block-diagonal channel-expanded 1x1 conv weight (transposed)
    # o_ref:  (nb, CP, H*W)
    x = x_ref[...].astype(jnp.float32)
    nb, cp, hw = x.shape

    # ---- gates: GAP -> lane-dense expanded 1x1 conv -> sigmoid --------------
    gap = jnp.mean(x, axis=-1)                                    # (nb, CP)
    wt = wT_ref[...].astype(jnp.float32)                          # (CP, K*CP)
    logits = gap[:, 0:1] * wt[0][None, :]
    for fc in range(1, cp):                                       # unrolled VPU FMAs
        logits = logits + gap[:, fc:fc + 1] * wt[fc][None, :]
    gates = jax.nn.sigmoid(logits)                                # (nb, K*CP)

    def coeff(kk):
        # per-(folded-channel) gate for tap kk (column layout: kk*CP + fc)
        return gates[:, kk * cp:(kk + 1) * cp][:, :, None]        # (nb, CP, 1)

    # position-within-row for every lane of the flattened H*W axis
    wpos = jax.lax.broadcasted_iota(jnp.int32, (1, 1, hw), 2) % width

    # ---- running tap accumulation (reflection handled via boundary selects) -
    acc = coeff(2) * x                                            # center tap

    # +/-1 taps
    x_m1 = pltpu.roll(x, 1, axis=2)                               # element p == x[p-1]
    x_p1 = pltpu.roll(x, hw - 1, axis=2)                          # element p == x[p+1]
    s_m1 = jnp.where(wpos >= 1, x_m1, x_p1)
    s_p1 = jnp.where(wpos <= width - 2, x_p1, x_m1)
    acc = acc + coeff(1) * s_m1 + coeff(3) * s_p1

    # +/-2 taps
    x_m2 = pltpu.roll(x, 2, axis=2)                               # element p == x[p-2]
    x_p2 = pltpu.roll(x, hw - 2, axis=2)                          # element p == x[p+2]
    s_m2 = jnp.where(wpos >= 2, x_m2, jnp.where(wpos == 1, x, x_p2))
    s_p2 = jnp.where(wpos <= width - 3, x_p2,
                     jnp.where(wpos == width - 2, x, x_m2))
    acc = acc + coeff(0) * s_m2 + coeff(4) * s_p2

    o_ref[...] = acc.astype(o_ref.dtype)


def spatial_strip_att_pallas(x, conv_w):
    """x: (N, C, H, W) float32; conv_w: (GROUP*K, C) float32 (1x1 conv, no bias)."""
    n, c, h, w = x.shape
    assert c % GROUP == 0
    assert w >= 3, "ReflectionPad2d with pad=2 requires W >= 3"
    cg = c // GROUP
    hw = h * w

    # Fold consecutive batch elements into the channel axis so the sublane
    # (second-to-last) block dim is a multiple of 8 f32 sublanes.
    pair = 1
    if c % 8 != 0:
        cand = 8 // math.gcd(c, 8)
        if n % cand == 0:
            pair = cand
    n2 = n // pair
    cp = pair * c

    # Block-diagonal channel-expanded weight, transposed to (CP, K*CP):
    #   wT[p*C + ch2, kk*CP + p*C + ch] = conv_w[(ch // cg) * K + kk, ch2]
    # so gates[:, kk*CP + fc] == sigmoid(<gap of the same batch-in-pair, conv row>).
    conv_np = np.asarray(conv_w, dtype=np.float32)
    wT = np.zeros((cp, K * cp), dtype=np.float32)
    for p in range(pair):
        for ch in range(c):
            fc = p * c + ch
            g = ch // cg
            for kk in range(K):
                wT[p * c:(p + 1) * c, kk * cp + fc] = conv_np[g * K + kk, :]
    wT = jnp.asarray(wT)

    x_fold = x.reshape(n2, cp, hw)            # free row-major reshape

    # Block sizing: temporaries-aware VMEM budget, no forced tiny steps.
    vmem_cap = 64 * 1024 * 1024
    try:
        info = pltpu.get_tpu_info()
        vmem_cap = int(getattr(info, "vmem_capacity_bytes", vmem_cap))
    except Exception:
        pass
    budget = max(4 << 20, min(vmem_cap // 4, 24 << 20))
    per_fold = cp * hw * x.dtype.itemsize
    # ~10 block-sized live values: 2x double-buffered in/out + ~6 body temps.
    max_nb = max(1, budget // (10 * per_fold))
    nb = min(n2, max_nb)
    # Split into >=2 grid steps (for the 2 v7x TensorCores) only when each step
    # carries enough bytes to amortize the ~0.35us per-step overhead.
    if nb == n2 and n2 >= 2 and nb * per_fold >= (1 << 20):
        nb = pl.cdiv(n2, 2)
    grid = (pl.cdiv(n2, nb),)

    kernel = functools.partial(_strip_att_kernel, width=w)

    out_fold = pl.pallas_call(
        kernel,
        out_shape=jax.ShapeDtypeStruct((n2, cp, hw), x.dtype),
        grid_spec=pltpu.PrefetchScalarGridSpec(
            num_scalar_prefetch=0,
            grid=grid,
            in_specs=[
                pl.BlockSpec((nb, cp, hw), lambda i: (i, 0, 0)),
                pl.BlockSpec((cp, K * cp), lambda i: (0, 0)),
            ],
            out_specs=pl.BlockSpec((nb, cp, hw), lambda i: (i, 0, 0)),
        ),
        compiler_params=pltpu.CompilerParams(
            dimension_semantics=("parallel",),
            vmem_limit_bytes=int(min(vmem_cap // 2, 64 << 20)),
        ),
    )(x_fold, wT)

    return out_fold.reshape(n, c, h, w)


def spatial_strip_att_reference(x, conv_w):
    """Pure-JAX reference mirroring the PyTorch forward exactly."""
    n, c, h, w = x.shape
    cg = c // GROUP
    gap = jnp.mean(x, axis=(2, 3))                       # (N, C)
    filt = jax.nn.sigmoid(gap @ conv_w.T)                # (N, G*K)
    xpad = jnp.pad(x, ((0, 0), (0, 0), (0, 0), (PAD, PAD)), mode="reflect")
    out = jnp.zeros_like(x)
    for g in range(GROUP):
        acc = jnp.zeros((n, cg, h, w), x.dtype)
        for kk in range(K):
            coeff = filt[:, g * K + kk][:, None, None, None]
            acc = acc + coeff * xpad[:, g * cg:(g + 1) * cg, :, kk:kk + w]
        out = out.at[:, g * cg:(g + 1) * cg].set(acc)
    return out


if __name__ == "__main__":
    key = jax.random.PRNGKey(0)
    kx, kw = jax.random.split(key)
    x = jax.random.normal(kx, (2, DIM, 16, 16), dtype=jnp.float32)
    # 1x1-conv weight: shape (group*kernel, dim) = (10, 4), no bias.
    conv_w = jax.random.normal(kw, (GROUP * K, DIM), dtype=jnp.float32) * 0.1

    out = spatial_strip_att_pallas(x, conv_w)
    out = jax.block_until_ready(out)

    ref = spatial_strip_att_reference(x, conv_w)
    assert out.shape == x.shape
    assert jnp.allclose(out, ref, atol=1e-5, rtol=1e-5), "mismatch vs reference"
    print("KERNEL_OK")
</pallas_src>

<mosaic_0001>
module attributes {stable_mosaic.version = 11 : i64} {
  func.func @_strip_att_kernel(%arg0: i32, %arg1: memref<1x8x256xf32, #tpu.memory_space<vmem>>, %arg2: memref<8x40xf32, #tpu.memory_space<vmem>>, %arg3: memref<1x8x256xf32, #tpu.memory_space<vmem>>) attributes {dimension_semantics = [#tpu.dimension_semantics<parallel>], iteration_bounds = array<i64: 1>, scalar_prefetch = 0 : i64, scratch_operands = 0 : i64, tpu.core_type = #tpu.core_type<tc>, window_params = [{transform_indices = @transform_0, window_bounds = array<i64: 1, 8, 256>}, {pipeline_mode = #tpu.pipeline_mode<synchronous>, transform_indices = @transform_1, window_bounds = array<i64: 8, 40>}, {transform_indices = @transform_2, window_bounds = array<i64: 1, 8, 256>}]} {
    %c0 = arith.constant 0 : index
    %c0_0 = arith.constant 0 : index
    %c0_1 = arith.constant 0 : index
    %0 = vector.load %arg1[%c0, %c0_0, %c0_1] : memref<1x8x256xf32, #tpu.memory_space<vmem>>, vector<1x8x256xf32>
    %cst = arith.constant dense<0.000000e+00> : vector<1x8xf32>
    %1 = vector.multi_reduction <add>, %0, %cst [2] : vector<1x8x256xf32> to vector<1x8xf32>
    %cst_2 = arith.constant 2.560000e+02 : f32
    %2 = vector.broadcast %cst_2 : f32 to vector<1x8xf32>
    %3 = arith.divf %1, %2 : vector<1x8xf32>
    %c0_3 = arith.constant 0 : index
    %c0_4 = arith.constant 0 : index
    %4 = vector.load %arg2[%c0_3, %c0_4] : memref<8x40xf32, #tpu.memory_space<vmem>>, vector<8x40xf32>
    %5 = vector.extract_strided_slice %3 {offsets = [0, 0], sizes = [1, 1], strides = [1, 1]} : vector<1x8xf32> to vector<1x1xf32>
    %6 = vector.extract_strided_slice %4 {offsets = [0, 0], sizes = [1, 40], strides = [1, 1]} : vector<8x40xf32> to vector<1x40xf32>
    %7 = vector.shape_cast %6 : vector<1x40xf32> to vector<40xf32>
    %8 = vector.shape_cast %7 : vector<40xf32> to vector<1x40xf32>
    %9 = vector.broadcast %5 : vector<1x1xf32> to vector<1x40xf32>
    %10 = arith.mulf %9, %8 : vector<1x40xf32>
    %11 = vector.extract_strided_slice %3 {offsets = [0, 1], sizes = [1, 1], strides = [1, 1]} : vector<1x8xf32> to vector<1x1xf32>
    %12 = vector.extract_strided_slice %4 {offsets = [1, 0], sizes = [1, 40], strides = [1, 1]} : vector<8x40xf32> to vector<1x40xf32>
    %13 = vector.shape_cast %12 : vector<1x40xf32> to vector<40xf32>
    %14 = vector.shape_cast %13 : vector<40xf32> to vector<1x40xf32>
    %15 = vector.broadcast %11 : vector<1x1xf32> to vector<1x40xf32>
    %16 = arith.mulf %15, %14 : vector<1x40xf32>
    %17 = arith.addf %10, %16 : vector<1x40xf32>
    %18 = vector.extract_strided_slice %3 {offsets = [0, 2], sizes = [1, 1], strides = [1, 1]} : vector<1x8xf32> to vector<1x1xf32>
    %19 = vector.extract_strided_slice %4 {offsets = [2, 0], sizes = [1, 40], strides = [1, 1]} : vector<8x40xf32> to vector<1x40xf32>
    %20 = vector.shape_cast %19 : vector<1x40xf32> to vector<40xf32>
    %21 = vector.shape_cast %20 : vector<40xf32> to vector<1x40xf32>
    %22 = vector.broadcast %18 : vector<1x1xf32> to vector<1x40xf32>
    %23 = arith.mulf %22, %21 : vector<1x40xf32>
    %24 = arith.addf %17, %23 : vector<1x40xf32>
    %25 = vector.extract_strided_slice %3 {offsets = [0, 3], sizes = [1, 1], strides = [1, 1]} : vector<1x8xf32> to vector<1x1xf32>
    %26 = vector.extract_strided_slice %4 {offsets = [3, 0], sizes = [1, 40], strides = [1, 1]} : vector<8x40xf32> to vector<1x40xf32>
    %27 = vector.shape_cast %26 : vector<1x40xf32> to vector<40xf32>
    %28 = vector.shape_cast %27 : vector<40xf32> to vector<1x40xf32>
    %29 = vector.broadcast %25 : vector<1x1xf32> to vector<1x40xf32>
    %30 = arith.mulf %29, %28 : vector<1x40xf32>
    %31 = arith.addf %24, %30 : vector<1x40xf32>
    %32 = vector.extract_strided_slice %3 {offsets = [0, 4], sizes = [1, 1], strides = [1, 1]} : vector<1x8xf32> to vector<1x1xf32>
    %33 = vector.extract_strided_slice %4 {offsets = [4, 0], sizes = [1, 40], strides = [1, 1]} : vector<8x40xf32> to vector<1x40xf32>
    %34 = vector.shape_cast %33 : vector<1x40xf32> to vector<40xf32>
    %35 = vector.shape_cast %34 : vector<40xf32> to vector<1x40xf32>
    %36 = vector.broadcast %32 : vector<1x1xf32> to vector<1x40xf32>
    %37 = arith.mulf %36, %35 : vector<1x40xf32>
    %38 = arith.addf %31, %37 : vector<1x40xf32>
    %39 = vector.extract_strided_slice %3 {offsets = [0, 5], sizes = [1, 1], strides = [1, 1]} : vector<1x8xf32> to vector<1x1xf32>
    %40 = vector.extract_strided_slice %4 {offsets = [5, 0], sizes = [1, 40], strides = [1, 1]} : vector<8x40xf32> to vector<1x40xf32>
    %41 = vector.shape_cast %40 : vector<1x40xf32> to vector<40xf32>
    %42 = vector.shape_cast %41 : vector<40xf32> to vector<1x40xf32>
    %43 = vector.broadcast %39 : vector<1x1xf32> to vector<1x40xf32>
    %44 = arith.mulf %43, %42 : vector<1x40xf32>
    %45 = arith.addf %38, %44 : vector<1x40xf32>
    %46 = vector.extract_strided_slice %3 {offsets = [0, 6], sizes = [1, 1], strides = [1, 1]} : vector<1x8xf32> to vector<1x1xf32>
    %47 = vector.extract_strided_slice %4 {offsets = [6, 0], sizes = [1, 40], strides = [1, 1]} : vector<8x40xf32> to vector<1x40xf32>
    %48 = vector.shape_cast %47 : vector<1x40xf32> to vector<40xf32>
    %49 = vector.shape_cast %48 : vector<40xf32> to vector<1x40xf32>
    %50 = vector.broadcast %46 : vector<1x1xf32> to vector<1x40xf32>
    %51 = arith.mulf %50, %49 : vector<1x40xf32>
    %52 = arith.addf %45, %51 : vector<1x40xf32>
    %53 = vector.extract_strided_slice %3 {offsets = [0, 7], sizes = [1, 1], strides = [1, 1]} : vector<1x8xf32> to vector<1x1xf32>
    %54 = vector.extract_strided_slice %4 {offsets = [7, 0], sizes = [1, 40], strides = [1, 1]} : vector<8x40xf32> to vector<1x40xf32>
    %55 = vector.shape_cast %54 : vector<1x40xf32> to vector<40xf32>
    %56 = vector.shape_cast %55 : vector<40xf32> to vector<1x40xf32>
    %57 = vector.broadcast %53 : vector<1x1xf32> to vector<1x40xf32>
    %58 = arith.mulf %57, %56 : vector<1x40xf32>
    %59 = arith.addf %52, %58 : vector<1x40xf32>
    %60 = arith.negf %59 : vector<1x40xf32>
    %61 = math.exp %60 : vector<1x40xf32>
    %cst_5 = arith.constant 1.000000e+00 : f32
    %62 = vector.broadcast %cst_5 : f32 to vector<1x40xf32>
    %63 = arith.addf %62, %61 : vector<1x40xf32>
    %64 = arith.divf %62, %63 : vector<1x40xf32>
    %65 = tpu.iota {dimensions = array<i32: 2>} : vector<1x1x256xi32>
    %c16_i32 = arith.constant 16 : i32
    %c0_i32 = arith.constant 0 : i32
    %66 = arith.cmpi eq, %c16_i32, %c0_i32 : i32
    %c1_i32 = arith.constant 1 : i32
    %67 = arith.select %66, %c1_i32, %c16_i32 : i32
    %68 = vector.broadcast %67 : i32 to vector<1x1x256xi32>
    %69 = arith.remsi %65, %68 : vector<1x1x256xi32>
    %c0_i32_6 = arith.constant 0 : i32
    %70 = vector.broadcast %c0_i32_6 : i32 to vector<1x1x256xi32>
    %71 = arith.cmpi ne, %69, %70 : vector<1x1x256xi32>
    %c0_i32_7 = arith.constant 0 : i32
    %72 = vector.broadcast %c0_i32_7 : i32 to vector<1x1x256xi32>
    %73 = arith.cmpi slt, %69, %72 : vector<1x1x256xi32>
    %c0_i32_8 = arith.constant 0 : i32
    %74 = arith.cmpi slt, %67, %c0_i32_8 : i32
    %75 = vector.broadcast %74 : i1 to vector<1x1x256xi1>
    %76 = vector.broadcast %75 : vector<1x1x256xi1> to vector<1x1x256xi1>
    %77 = arith.xori %73, %76 : vector<1x1x256xi1>
    %78 = arith.andi %77, %71 : vector<1x1x256xi1>
    %79 = vector.broadcast %67 : i32 to vector<1x1x256xi32>
    %80 = arith.addi %69, %79 : vector<1x1x256xi32>
    %81 = arith.select %78, %80, %69 : vector<1x1x256xi1>, vector<1x1x256xi32>
    %82 = vector.extract_strided_slice %64 {offsets = [0, 16], sizes = [1, 8], strides = [1, 1]} : vector<1x40xf32> to vector<1x8xf32>
    %83 = vector.shape_cast %82 : vector<1x8xf32> to vector<1x8x1xf32>
    %84 = vector.broadcast %83 : vector<1x8x1xf32> to vector<1x8x256xf32>
    %85 = arith.mulf %84, %0 : vector<1x8x256xf32>
    %c1_i32_9 = arith.constant 1 : i32
    %86 = tpu.dynamic_rotate %0 by %c1_i32_9 dim 2 : vector<1x8x256xf32>, i32 -> vector<1x8x256xf32>
    %c255_i32 = arith.constant 255 : i32
    %87 = tpu.dynamic_rotate %0 by %c255_i32 dim 2 : vector<1x8x256xf32>, i32 -> vector<1x8x256xf32>
    %c1_i32_10 = arith.constant 1 : i32
    %88 = vector.broadcast %c1_i32_10 : i32 to vector<1x1x256xi32>
    %89 = arith.cmpi sge, %81, %88 : vector<1x1x256xi32>
    %90 = vector.shape_cast %89 : vector<1x1x256xi1> to vector<1x1x256xi1>
    %91 = vector.broadcast %90 : vector<1x1x256xi1> to vector<1x8x256xi1>
    %92 = arith.select %91, %86, %87 : vector<1x8x256xi1>, vector<1x8x256xf32>
    %c14_i32 = arith.constant 14 : i32
    %93 = vector.broadcast %c14_i32 : i32 to vector<1x1x256xi32>
    %94 = arith.cmpi sle, %81, %93 : vector<1x1x256xi32>
    %95 = vector.shape_cast %94 : vector<1x1x256xi1> to vector<1x1x256xi1>
    %96 = vector.broadcast %95 : vector<1x1x256xi1> to vector<1x8x256xi1>
    %97 = arith.select %96, %87, %86 : vector<1x8x256xi1>, vector<1x8x256xf32>
    %98 = vector.extract_strided_slice %64 {offsets = [0, 8], sizes = [1, 8], strides = [1, 1]} : vector<1x40xf32> to vector<1x8xf32>
    %99 = vector.shape_cast %98 : vector<1x8xf32> to vector<1x8x1xf32>
    %100 = vector.broadcast %99 : vector<1x8x1xf32> to vector<1x8x256xf32>
    %101 = arith.mulf %100, %92 : vector<1x8x256xf32>
    %102 = arith.addf %85, %101 : vector<1x8x256xf32>
    %103 = vector.extract_strided_slice %64 {offsets = [0, 24], sizes = [1, 8], strides = [1, 1]} : vector<1x40xf32> to vector<1x8xf32>
    %104 = vector.shape_cast %103 : vector<1x8xf32> to vector<1x8x1xf32>
    %105 = vector.broadcast %104 : vector<1x8x1xf32> to vector<1x8x256xf32>
    %106 = arith.mulf %105, %97 : vector<1x8x256xf32>
    %107 = arith.addf %102, %106 : vector<1x8x256xf32>
    %c2_i32 = arith.constant 2 : i32
    %108 = tpu.dynamic_rotate %0 by %c2_i32 dim 2 : vector<1x8x256xf32>, i32 -> vector<1x8x256xf32>
    %c254_i32 = arith.constant 254 : i32
    %109 = tpu.dynamic_rotate %0 by %c254_i32 dim 2 : vector<1x8x256xf32>, i32 -> vector<1x8x256xf32>
    %c2_i32_11 = arith.constant 2 : i32
    %110 = vector.broadcast %c2_i32_11 : i32 to vector<1x1x256xi32>
    %111 = arith.cmpi sge, %81, %110 : vector<1x1x256xi32>
    %c1_i32_12 = arith.constant 1 : i32
    %112 = vector.broadcast %c1_i32_12 : i32 to vector<1x1x256xi32>
    %113 = arith.cmpi eq, %81, %112 : vector<1x1x256xi32>
    %114 = vector.shape_cast %113 : vector<1x1x256xi1> to vector<1x1x256xi1>
    %115 = vector.broadcast %114 : vector<1x1x256xi1> to vector<1x8x256xi1>
    %116 = arith.select %115, %0, %109 : vector<1x8x256xi1>, vector<1x8x256xf32>
    %117 = vector.shape_cast %111 : vector<1x1x256xi1> to vector<1x1x256xi1>
    %118 = vector.broadcast %117 : vector<1x1x256xi1> to vector<1x8x256xi1>
    %119 = arith.select %118, %108, %116 : vector<1x8x256xi1>, vector<1x8x256xf32>
    %c13_i32 = arith.constant 13 : i32
    %120 = vector.broadcast %c13_i32 : i32 to vector<1x1x256xi32>
    %121 = arith.cmpi sle, %81, %120 : vector<1x1x256xi32>
    %c14_i32_13 = arith.constant 14 : i32
    %122 = vector.broadcast %c14_i32_13 : i32 to vector<1x1x256xi32>
    %123 = arith.cmpi eq, %81, %122 : vector<1x1x256xi32>
    %124 = vector.shape_cast %123 : vector<1x1x256xi1> to vector<1x1x256xi1>
    %125 = vector.broadcast %124 : vector<1x1x256xi1> to vector<1x8x256xi1>
    %126 = arith.select %125, %0, %108 : vector<1x8x256xi1>, vector<1x8x256xf32>
    %127 = vector.shape_cast %121 : vector<1x1x256xi1> to vector<1x1x256xi1>
    %128 = vector.broadcast %127 : vector<1x1x256xi1> to vector<1x8x256xi1>
    %129 = arith.select %128, %109, %126 : vector<1x8x256xi1>, vector<1x8x256xf32>
    %130 = vector.extract_strided_slice %64 {offsets = [0, 0], sizes = [1, 8], strides = [1, 1]} : vector<1x40xf32> to vector<1x8xf32>
    %131 = vector.shape_cast %130 : vector<1x8xf32> to vector<1x8x1xf32>
    %132 = vector.broadcast %131 : vector<1x8x1xf32> to vector<1x8x256xf32>
    %133 = arith.mulf %132, %119 : vector<1x8x256xf32>
    %134 = arith.addf %107, %133 : vector<1x8x256xf32>
    %135 = vector.extract_strided_slice %64 {offsets = [0, 32], sizes = [1, 8], strides = [1, 1]} : vector<1x40xf32> to vector<1x8xf32>
    %136 = vector.shape_cast %135 : vector<1x8xf32> to vector<1x8x1xf32>
    %137 = vector.broadcast %136 : vector<1x8x1xf32> to vector<1x8x256xf32>
    %138 = arith.mulf %137, %129 : vector<1x8x256xf32>
    %139 = arith.addf %134, %138 : vector<1x8x256xf32>
    %c0_14 = arith.constant 0 : index
    %c0_15 = arith.constant 0 : index
    %c0_16 = arith.constant 0 : index
    %140 = vector.load %arg3[%c0_14, %c0_15, %c0_16] : memref<1x8x256xf32, #tpu.memory_space<vmem>>, vector<1x8x256xf32>
    tpu.vector_store %arg3[%c0_14, %c0_15, %c0_16], %139 {strides = array<i32>} : memref<1x8x256xf32, #tpu.memory_space<vmem>>, vector<1x8x256xf32>,
    return
  }
  func.func @transform_0(%arg0: i32) -> (i32, i32, i32) {
    %c0_i32 = arith.constant 0 : i32
    %c0_i32_0 = arith.constant 0 : i32
    %c0_i32_1 = arith.constant 0 : i32
    return %arg0, %c0_i32, %c0_i32_0 : i32, i32, i32
  }
  func.func @transform_1(%arg0: i32) -> (i32, i32) {
    %c0_i32 = arith.constant 0 : i32
    %c0_i32_0 = arith.constant 0 : i32
    %c0_i32_1 = arith.constant 0 : i32
    return %c0_i32, %c0_i32_0 : i32, i32
  }
  func.func @transform_2(%arg0: i32) -> (i32, i32, i32) {
    %c0_i32 = arith.constant 0 : i32
    %c0_i32_0 = arith.constant 0 : i32
    %c0_i32_1 = arith.constant 0 : i32
    return %arg0, %c0_i32, %c0_i32_0 : i32, i32, i32
  }
}

</mosaic_0001>

<llo_original>
// kernel: tpu_custom_call.1
$region0: #{tpu_custom_call.1}
  #allocation0 [shape = 'u32[]', space=smem, size = 0x4, offset = 0x4, fixed_abs, tag = 'smem constant byte address 0x4 - core index']
  #allocation1 [shape = 'u32[144,128]{1,0:T(1,128)}', space=vmem, size = 0x12000, scoped, tag = 'internal scratch']
  %s0 = inlined_call_operand.hbm [shape: f32[1,8,256], index: 0, kind: input, shape index: {}]
  %s1 = inlined_call_operand.hbm [shape: f32[8,40], index: 1, kind: input, shape index: {}]
  %s2 = inlined_call_operand.hbm [shape: f32[1,8,256], index: 2, kind: output, shape index: {}]
  %s3 = sld [smem:[#allocation0]]
  $region26: #{tpu_custom_call.1} parent=0
    _
  %s5 = ssub.s32 1, %s3
  %s6 = scalar_select 0, %s5, %s3
  $region1: #{tpu_custom_call.1} parent=0
    #allocation2 [shape = 'u8[8192]{0}', space=vmem, size = 0x2000, scoped, tag = 'input window, operand 0, single buffered']
    #allocation3 [shape = 's32[1]{0}', space=sflag, size = 0x4, scoped, tag = 'scoped memory for tpu_custom_call.1']
    #allocation4 [shape = 's32[1]{0}', space=sflag, size = 0x4, scoped, tag = 'scoped memory for tpu_custom_call.1']
    #allocation5 [shape = 'u8[4096]{0}', space=vmem, size = 0x1000, scoped, tag = 'input window, operand 1, single buffered']
    #allocation6 [shape = 's32[1]{0}', space=sflag, size = 0x4, scoped, tag = 'scoped memory for tpu_custom_call.1']
    #allocation7 [shape = 'u8[8192]{0}', space=vmem, size = 0x2000, scoped, tag = 'output window, operand 0, single buffered']
    %7 = vsyncpa [#allocation3], 0
    %8 = vsyncpa [#allocation6], 0
    %9 = vsyncpa [#allocation4], 0
    // Predicated region
    $region2: #{tpu_custom_call.1} parent=1 // pred_check
      _
    $region3: #{tpu_custom_call.1} parent=1 // pred_check_branch
      %11 = sbr.rel (0) target = $region5
    $region4: #{tpu_custom_call.1} parent=1 // pred_region
      %s13 = ssub.s32 256, 256
      %14 = vsyncadd [#allocation3], %s13
      %s16 = sshll.u32 [#allocation2], 4
      %s17 = int_to_ptr.vmem [resolvable:$true] %s16
      %19 = dma.hbm_to_vmem [thread:$0]  %s0, 256, %s17, [#allocation3]
    $region5: #{tpu_custom_call.1} parent=1 // pred_fallthru
      _
    // Predicated region
    $region6: #{tpu_custom_call.1} parent=1 // pred_check
      _
    $region7: #{tpu_custom_call.1} parent=1 // pred_check_branch
      %21 = sbr.rel (0) target = $region9
    $region8: #{tpu_custom_call.1} parent=1 // pred_region
      %s23 = ssub.s32 128, 128
      %24 = vsyncadd [#allocation6], %s23
      %s26 = sshll.u32 [#allocation5], 4
      %s27 = int_to_ptr.vmem [resolvable:$true] %s26
      %29 = dma.hbm_to_vmem [thread:$0]  %s1, 128, %s27, [#allocation6]
    $region9: #{tpu_custom_call.1} parent=1 // pred_fallthru
      _
    // Predicated region
    $region10: #{tpu_custom_call.1} parent=1 // pred_check
      _
    $region11: #{tpu_custom_call.1} parent=1 // pred_check_branch
      %31 = sbr.rel (0) target = $region13
    $region12: #{tpu_custom_call.1} parent=1 // pred_region
      %32 = dma.done [#allocation3], 256
    $region13: #{tpu_custom_call.1} parent=1 // pred_fallthru
      _
    // Predicated region
    $region14: #{tpu_custom_call.1} parent=1 // pred_check
      _
    $region15: #{tpu_custom_call.1} parent=1 // pred_check_branch
      %34 = sbr.rel (0) target = $region17
    $region16: #{tpu_custom_call.1} parent=1 // pred_region
      %35 = dma.done [#allocation6], 128
    $region17: #{tpu_custom_call.1} parent=1 // pred_fallthru
      _
    %v36 = vld [vmem:[#allocation2] sm:$0xff]
    %v37 = vld [vmem:[#allocation2 + $0x8] sm:$0xff]
    %v38 = vadd.f32 %v36, %v37
    %39 = vadd.xlane.f32.xlu0 %v38
    %v40 = vpop.xlane.xlu0 %39
    %v41 = vrcp.pop 256.0
    %v42 = vmul.f32 %v40, %v41
    %v43 = vld [vmem:[#allocation5] sm:$0xff]
    %v44 = vmul.f32 %v42, %v43
    %v46 = vrot.slane %v44, 1
    %v48 = vadd.f32 %v44, %v46
    %v49 = vrot.slane %v44, 2
    %v51 = vadd.f32 %v48, %v49
    %v52 = vrot.slane %v44, 3
    %v54 = vadd.f32 %v51, %v52
    %v55 = vrot.slane %v44, 4
    %v57 = vadd.f32 %v54, %v55
    %v58 = vrot.slane %v44, 5
    %v60 = vadd.f32 %v57, %v58
    %v61 = vrot.slane %v44, 6
    %v63 = vadd.f32 %v60, %v61
    %v64 = vrot.slane %v44, 7
    %v66 = vadd.f32 %v63, %v64
    %v67 = vxor.u32 %v66, 2147483648
    %v68 = vmul.f32 %v67, 1.442695
    %v69 = vpow.pop %v68
    %v70 = vadd.f32 %v69, 1.0
    %v71 = vrcp.pop %v70
    %v72 = vmul.f32 1.0, %v71
    %v73 = vlaneseq
    %v74 = vand.u32 %v73, 127
    %v75 = vadd.s32 %v74, 128
    %vm76 = vcmp.lt.s32.totalorder %v74, 0
    %v77 = vsub.s32 0, %v74
    %v78 = vsel %vm76, %v77, %v74
    %v79 = vshrl.u32 %v78, 4
    %v80 = vand.u32 %v78, 15
    %v81 = vsub.s32 0, %v80
    %v82 = vsel %vm76, %v81, %v80
    %vm83 = vcmp.lt.s32.totalorder %v75, 0
    %v84 = vsub.s32 0, %v75
    %v85 = vsel %vm83, %v84, %v75
    %v86 = vshrl.u32 %v85, 4
    %v87 = vand.u32 %v85, 15
    %v88 = vsub.s32 0, %v87
    %v89 = vsel %vm83, %v88, %v87
    %vm90 = vcmp.ne.s32.totalorder %v82, 0
    %vm91 = vcmp.ne.s32.totalorder %v89, 0
    %vm92 = vcmp.lt.s32.totalorder %v82, 0
    %vm93 = vcmp.lt.s32.totalorder %v89, 0
    %vm94 = vmand %vm92, %vm90
    %vm95 = vmand %vm93, %vm91
    %v96 = vadd.s32 %v82, 16
    %v97 = vadd.s32 %v89, 16
    %v98 = vsel %vm94, %v96, %v82
    %v99 = vsel %vm95, %v97, %v89
    %v100 = vlaneseq
    %v101 = vshrl.u32 %v100, 7
    %v102 = vsub.s32 0, %v101
    %v103 = vrot.slane %v72, %v102
    %s105 = sor.u32 256, 16
    %106 = vbcast.lane.b32.xlu0 %v103, %s105
    %v107 = vpop.permute.xlu0 %106
    %v108 = vmul.f32 %v107, %v36
    %v109 = vmul.f32 %v107, %v37
    %110 = vrot.lane.b32.xlu0 %v36, 1
    %v111 = vpop.permute.xlu0 %110
    %112 = vrot.lane.b32.xlu0 %v37, 1
    %v113 = vpop.permute.xlu0 %112
    %vm114 = vcmp.lt.s32.totalorder %v74, 1
    %v115 = vsel %vm114, %v111, %v113
    %v116 = vsel %vm114, %v113, %v111
    %117 = vrot.lane.b32.xlu0 %v36, 127
    %v118 = vpop.permute.xlu0 %117
    %119 = vrot.lane.b32.xlu0 %v37, 127
    %v120 = vpop.permute.xlu0 %119
    %vm121 = vcmp.lt.s32.totalorder %v74, 127
    %v122 = vsel %vm121, %v118, %v120
    %v123 = vsel %vm121, %v120, %v118
    %vm124 = vcmp.ge.s32.totalorder %v98, 1
    %vm125 = vcmp.ge.s32.totalorder %v99, 1
    %v126 = vsel %vm124, 1, 0
    %v127 = vsel %vm125, 1, 0
    %vm128 = vcmp.eq.s32.totalorder %v126, 1
    %vm129 = vcmp.eq.s32.totalorder %v127, 1
    %v130 = vsel %vm128, %v116, %v122
    %v131 = vsel %vm129, %v115, %v123
    %vm132 = vcmp.le.s32.totalorder %v98, 14
    %vm133 = vcmp.le.s32.totalorder %v99, 14
    %v134 = vsel %vm132, 1, 0
    %v135 = vsel %vm133, 1, 0
    %vm136 = vcmp.eq.s32.totalorder %v134, 1
    %vm137 = vcmp.eq.s32.totalorder %v135, 1
    %v138 = vsel %vm136, %v122, %v116
    %v139 = vsel %vm137, %v123, %v115
    %s141 = sor.u32 256, 8
    %142 = vbcast.lane.b32.xlu0 %v103, %s141
    %v143 = vpop.permute.xlu0 %142
    %v144 = vmul.f32 %v143, %v130
    %v145 = vmul.f32 %v143, %v131
    %v146 = vadd.f32 %v108, %v144
    %v147 = vadd.f32 %v109, %v145
    %s149 = sor.u32 256, 24
    %150 = vbcast.lane.b32.xlu0 %v103, %s149
    %v151 = vpop.permute.xlu0 %150
    %v152 = vmul.f32 %v151, %v138
    %v153 = vmul.f32 %v151, %v139
    %v154 = vadd.f32 %v146, %v152
    %v155 = vadd.f32 %v147, %v153
    %156 = vrot.lane.b32.xlu0 %v36, 2
    %v157 = vpop.permute.xlu0 %156
    %158 = vrot.lane.b32.xlu0 %v37, 2
    %v159 = vpop.permute.xlu0 %158
    %vm160 = vcmp.lt.s32.totalorder %v74, 2
    %v161 = vsel %vm160, %v157, %v159
    %v162 = vsel %vm160, %v159, %v157
    %163 = vrot.lane.b32.xlu0 %v36, 126
    %v164 = vpop.permute.xlu0 %163
    %165 = vrot.lane.b32.xlu0 %v37, 126
    %v166 = vpop.permute.xlu0 %165
    %vm167 = vcmp.lt.s32.totalorder %v74, 126
    %v168 = vsel %vm167, %v164, %v166
    %v169 = vsel %vm167, %v166, %v164
    %vm170 = vcmp.ge.s32.totalorder %v98, 2
    %vm171 = vcmp.ge.s32.totalorder %v99, 2
    %vm172 = vcmp.eq.s32.totalorder %v98, 1
    %vm173 = vcmp.eq.s32.totalorder %v99, 1
    %v174 = vsel %vm172, 1, 0
    %v175 = vsel %vm173, 1, 0
    %vm176 = vcmp.eq.s32.totalorder %v174, 1
    %vm177 = vcmp.eq.s32.totalorder %v175, 1
    %v178 = vsel %vm176, %v36, %v168
    %v179 = vsel %vm177, %v37, %v169
    %v180 = vsel %vm170, 1, 0
    %v181 = vsel %vm171, 1, 0
    %vm182 = vcmp.eq.s32.totalorder %v180, 1
    %vm183 = vcmp.eq.s32.totalorder %v181, 1
    %v184 = vsel %vm182, %v162, %v178
    %v185 = vsel %vm183, %v161, %v179
    %vm186 = vcmp.le.s32.totalorder %v98, 13
    %vm187 = vcmp.le.s32.totalorder %v99, 13
    %vm188 = vcmp.eq.s32.totalorder %v98, 14
    %vm189 = vcmp.eq.s32.totalorder %v99, 14
    %v190 = vsel %vm188, 1, 0
    %v191 = vsel %vm189, 1, 0
    %vm192 = vcmp.eq.s32.totalorder %v190, 1
    %vm193 = vcmp.eq.s32.totalorder %v191, 1
    %v194 = vsel %vm192, %v36, %v162
    %v195 = vsel %vm193, %v37, %v161
    %v196 = vsel %vm186, 1, 0
    %v197 = vsel %vm187, 1, 0
    %vm198 = vcmp.eq.s32.totalorder %v196, 1
    %vm199 = vcmp.eq.s32.totalorder %v197, 1
    %v200 = vsel %vm198, %v168, %v194
    %v201 = vsel %vm199, %v169, %v195
    %203 = vbcast.lane.b32.xlu0 %v103, 256
    %v204 = vpop.permute.xlu0 %203
    %v205 = vmul.f32 %v204, %v184
    %v206 = vmul.f32 %v204, %v185
    %v207 = vadd.f32 %v154, %v205
    %v208 = vadd.f32 %v155, %v206
    %s210 = sor.u32 256, 32
    %211 = vbcast.lane.b32.xlu0 %v103, %s210
    %v212 = vpop.permute.xlu0 %211
    %v213 = vmul.f32 %v212, %v200
    %v214 = vmul.f32 %v212, %v201
    %v215 = vadd.f32 %v207, %v213
    %v216 = vadd.f32 %v208, %v214
    %217 = vst [vmem:[#allocation7] sm:$0xff] %v215
    %218 = vst [vmem:[#allocation7 + $0x8] sm:$0xff] %v216
    // Predicated region
    $region18: #{tpu_custom_call.1} parent=1 // pred_check
      _
    $region19: #{tpu_custom_call.1} parent=1 // pred_check_branch
      %220 = sbr.rel (0) target = $region21
    $region20: #{tpu_custom_call.1} parent=1 // pred_region
      %s222 = ssub.s32 256, 256
      %223 = vsyncadd [#allocation4], %s222
      %s225 = sshll.u32 [#allocation7], 4
      %s226 = int_to_ptr.vmem [resolvable:$true] %s225
      %228 = dma.vmem_to_hbm [thread:$0]  %s226, 256, %s2, [#allocation4]
    $region21: #{tpu_custom_call.1} parent=1 // pred_fallthru
      _
    // Predicated region
    $region22: #{tpu_custom_call.1} parent=1 // pred_check
      _
    $region23: #{tpu_custom_call.1} parent=1 // pred_check_branch
      %230 = sbr.rel (0) target = $region25
    $region24: #{tpu_custom_call.1} parent=1 // pred_region
      %231 = dma.done [#allocation4], 256
    $region25: #{tpu_custom_call.1} parent=1 // pred_fallthru
      _
    %232 = vsyncpa [#allocation3], 1
    %233 = vsyncpa [#allocation6], 1
    %234 = vsyncpa [#allocation4], 1

</llo_original>
